<compile_context>
chip_gen: v5e
topology: v5e:2x2
jax: 0.10.0
libtpu: 0.0.40
codegen_flags: <defaults>
</compile_context>

<pallas_src>
import functools
import math

import jax
import jax.numpy as jnp
from jax.experimental import pallas as pl
from jax.experimental.pallas import tpu as pltpu


def _round_up(x, m):
    return -(-x // m) * m


def model1_kernel(x_ref, dft_ref, conv_ref, conv_b_ref, w1t_ref, b1_ref,
                  w2t_ref, b2_ref, out_ref, *, hp, dp):
    # ---- half-spectrum |FFT| via one fused (cos|sin) matmul -----------------
    xb = x_ref[...].astype(jnp.bfloat16)                              # (TB, L)
    spec = jnp.dot(xb, dft_ref[...],
                   preferred_element_type=jnp.float32)                # (TB, 2*HP)
    re = spec[:, :hp]                                                 # lane-aligned split
    im = spec[:, hp:]
    mag = jnp.sqrt(re * re + im * im)                                 # (TB, HP)

    # ---- Conv1d(k=5,pad=2) + ReLU + MaxPool1d(2): one fused (even|odd) matmul
    conv = jnp.dot(mag.astype(jnp.bfloat16), conv_ref[...],
                   preferred_element_type=jnp.float32)                # (TB, 2*DP)
    even = conv[:, :dp]
    odd = conv[:, dp:]
    # maxpool(relu(conv + b)) == relu(max(even, odd) + b)  (relu monotone)
    pooled = jnp.maximum(jnp.maximum(even, odd) + conv_b_ref[...], 0.0)

    # ---- fc1 + ReLU, fc2 -----------------------------------------------------
    h = jnp.dot(pooled.astype(jnp.bfloat16), w1t_ref[...],
                preferred_element_type=jnp.float32) + b1_ref[...]
    h = jnp.maximum(h, 0.0)
    o = jnp.dot(h.astype(jnp.bfloat16), w2t_ref[...],
                preferred_element_type=jnp.float32) + b2_ref[...]
    out_ref[...] = o                                                  # (TB, DP)


def init_params(L, key):
    """Deterministic parameter / constant setup (plain-JAX glue)."""
    assert L % 2 == 0, "half-spectrum / maxpool folding assumes even L"
    D = L // 2
    H = L // 2 + 1                  # half-spectrum bins (real input)
    HP = _round_up(H, 128)          # lane-padded spectrum width
    DP = _round_up(D, 128)          # lane-padded feature width
    K = 5                           # ConvolutionKernelSize
    PAD = 2                         # ConvolutionPadding
    k_cw, k_cb, k_w1, k_b1, k_w2, k_b2 = jax.random.split(key, 6)

    # Conv1d(1, 1, 5): xavier_uniform weight (fan_in=fan_out=K), default bias.
    cw_bound = math.sqrt(6.0 / (K + K))
    conv_w = jax.random.uniform(k_cw, (K,), jnp.float32, -cw_bound, cw_bound)
    cb_bound = 1.0 / math.sqrt(1 * K)
    conv_b = jax.random.uniform(k_cb, (1,), jnp.float32, -cb_bound, cb_bound)

    # (L, L) Toeplitz so that (x @ T)[:, j] == sum_k w[k] * x[:, j + k - PAD].
    conv_mat = jnp.zeros((L, L), jnp.float32)
    for k in range(K):
        conv_mat = conv_mat + conv_w[k] * jnp.eye(L, L, k=(PAD - k),
                                                  dtype=jnp.float32)
    # Fold the real-FFT mirror: |X[k]| == |X[L-k]| -> row i += row L-i, 1<=i<L/2.
    mid = L // 2
    fold = conv_mat[:H, :]
    fold = fold.at[1:mid, :].add(conv_mat[L - 1:mid:-1, :])
    # Fold MaxPool1d(2) and pack even|odd halves side-by-side (single matmul).
    conv_comb = jnp.zeros((HP, 2 * DP), jnp.float32)
    conv_comb = conv_comb.at[:H, :D].set(fold[:, 0::2])
    conv_comb = conv_comb.at[:H, DP:DP + D].set(fold[:, 1::2])
    conv_comb = conv_comb.astype(jnp.bfloat16)
    # Conv bias as a (1, DP) row; padded columns stay exactly zero after relu.
    conv_b_row = jnp.zeros((1, DP), jnp.float32).at[:, :D].set(conv_b[0])

    # Half-spectrum real-DFT with norm='forward' 1/L folded in, cos|sin packed.
    n = jnp.arange(L, dtype=jnp.int32)[:, None]
    kk = jnp.arange(H, dtype=jnp.int32)[None, :]
    ang = (2.0 * math.pi / L) * ((n * kk) % L).astype(jnp.float32)
    scale = 1.0 / L
    dft_comb = jnp.zeros((L, 2 * HP), jnp.float32)
    dft_comb = dft_comb.at[:, :H].set(jnp.cos(ang) * scale)
    dft_comb = dft_comb.at[:, HP:HP + H].set(-jnp.sin(ang) * scale)
    dft_comb = dft_comb.astype(jnp.bfloat16)

    # Linear(D, D) x2: xavier_uniform weights, default uniform biases,
    # zero-padded to (DP, DP) so the matmuls / stores are lane-dense.
    w_bound = math.sqrt(6.0 / (D + D))
    b_bound = 1.0 / math.sqrt(D)
    w1 = jax.random.uniform(k_w1, (D, D), jnp.float32, -w_bound, w_bound)
    b1 = jax.random.uniform(k_b1, (1, D), jnp.float32, -b_bound, b_bound)
    w2 = jax.random.uniform(k_w2, (D, D), jnp.float32, -w_bound, w_bound)
    b2 = jax.random.uniform(k_b2, (1, D), jnp.float32, -b_bound, b_bound)

    def pad_wt(w):   # (D, D) -> transposed, zero-padded (DP, DP) bf16
        return jnp.zeros((DP, DP), jnp.float32).at[:D, :D].set(w.T).astype(jnp.bfloat16)

    def pad_b(b):    # (1, D) -> zero-padded (1, DP) f32
        return jnp.zeros((1, DP), jnp.float32).at[:, :D].set(b)

    return dict(hp=HP, dp=DP,
                dft_comb=dft_comb, conv_comb=conv_comb, conv_b_row=conv_b_row,
                w1t=pad_wt(w1), b1=pad_b(b1),
                w2t=pad_wt(w2), b2=pad_b(b2))


def _padded_bytes(shape, dtype):
    """Tile-padded VMEM footprint of one 1-D/2-D-or-more array."""
    dtype = jnp.dtype(dtype)
    if len(shape) == 1:
        shape = (1, shape[0])
    r, c = shape[-2], shape[-1]
    sub = 8 * (4 // dtype.itemsize) if dtype.itemsize < 4 else 8
    rp = _round_up(r, sub)
    cp = _round_up(c, 128)
    lead = 1
    for s in shape[:-2]:
        lead *= s
    return lead * rp * cp * dtype.itemsize


def model1_forward(x_ncl, params):
    B, C, L = x_ncl.shape
    assert C == 1, "Model1 has a single channel (ModelBase.InputShape[1] == 1)"
    D = (L // 2) * C
    HP, DP = params["hp"], params["dp"]

    x2d = x_ncl.reshape(B, L)                    # glue: squeeze channel
    if x2d.dtype not in (jnp.dtype(jnp.float32), jnp.dtype(jnp.bfloat16)):
        x2d = x2d.astype(jnp.float32)            # accept f32 or bf16 directly

    # Batch tile: multiple of 8 sublanes, up to 256 (MXU M tile on v6e/v7x).
    TB = min(256, _round_up(B, 8))
    B_pad = _round_up(B, TB)
    if B_pad != B:
        x2d = jnp.pad(x2d, ((0, B_pad - B), (0, 0)))
    grid = (B_pad // TB,)

    consts = (params["dft_comb"], params["conv_comb"], params["conv_b_row"],
              params["w1t"], params["b1"], params["w2t"], params["b2"])

    in_specs = [pl.BlockSpec((TB, L), lambda i: (i, 0))]
    in_specs += [pl.BlockSpec(a.shape, lambda i: (0, 0)) for a in consts]
    out_specs = pl.BlockSpec((TB, DP), lambda i: (i, 0))

    # VMEM budget: double-buffered constants + double-buffered x/out tiles +
    # per-tile temporaries, clamped below v7x's 64 MiB per-core VMEM.
    const_bytes = sum(_padded_bytes(a.shape, a.dtype) for a in consts)
    io_bytes = (_padded_bytes((TB, L), x2d.dtype) +
                _padded_bytes((TB, DP), jnp.float32))
    temp_bytes = (
        _padded_bytes((TB, 2 * HP), jnp.float32) +      # spec (re|im)
        _padded_bytes((TB, 2 * DP), jnp.float32) +      # conv (even|odd)
        _padded_bytes((TB, HP), jnp.float32) +          # mag
        3 * _padded_bytes((TB, DP), jnp.float32) +      # pooled, h, o
        _padded_bytes((TB, L), jnp.bfloat16) +          # x cast
        _padded_bytes((TB, HP), jnp.bfloat16) +         # mag cast
        2 * _padded_bytes((TB, DP), jnp.bfloat16))      # pooled/h casts
    vmem_limit = 2 * const_bytes + 2 * io_bytes + temp_bytes + (4 << 20)
    vmem_limit = int(max(16 << 20, min(vmem_limit, 60 << 20)))

    kernel = functools.partial(model1_kernel, hp=HP, dp=DP)
    out = pl.pallas_call(
        kernel,
        grid=grid,
        in_specs=in_specs,
        out_specs=out_specs,
        out_shape=jax.ShapeDtypeStruct((B_pad, DP), jnp.float32),
        compiler_params=pltpu.CompilerParams(
            dimension_semantics=("parallel",),       # megacore batch sharding (v7x)
            vmem_limit_bytes=vmem_limit),
    )(x2d, *consts)

    return out[:B, :D]                               # glue: strip pad rows / cols


if __name__ == "__main__":
    # Small shapes consistent with the module: (B, C, L) with C = 1.
    # (The original uses L = 2000; scaled to L = 64 for the demo. All matmul
    #  shapes and the batch grid already support large B / L.)
    B, C, L = 2, 1, 64
    key = jax.random.PRNGKey(0)
    k_x, k_p = jax.random.split(key)

    x = jax.random.normal(k_x, (B, C, L), dtype=jnp.float32)
    params = init_params(L, k_p)

    out = model1_forward(x, params)
    jax.block_until_ready(out)
    assert out.shape == (B, (L // 2) * C)
    assert bool(jnp.all(jnp.isfinite(out)))
    print("KERNEL_OK")
</pallas_src>

<mosaic_0001>
module attributes {stable_mosaic.version = 11 : i64} {
  func.func @model1_kernel(%arg0: i32, %arg1: memref<8x64xf32, #tpu.memory_space<vmem>>, %arg2: memref<64x256xbf16, #tpu.memory_space<vmem>>, %arg3: memref<128x256xbf16, #tpu.memory_space<vmem>>, %arg4: memref<1x128xf32, #tpu.memory_space<vmem>>, %arg5: memref<128x128xbf16, #tpu.memory_space<vmem>>, %arg6: memref<1x128xf32, #tpu.memory_space<vmem>>, %arg7: memref<128x128xbf16, #tpu.memory_space<vmem>>, %arg8: memref<1x128xf32, #tpu.memory_space<vmem>>, %arg9: memref<8x128xf32, #tpu.memory_space<vmem>>) attributes {dimension_semantics = [#tpu.dimension_semantics<parallel>], iteration_bounds = array<i64: 1>, scalar_prefetch = 0 : i64, scratch_operands = 0 : i64, tpu.core_type = #tpu.core_type<tc>, window_params = [{transform_indices = @transform_0, window_bounds = array<i64: 8, 64>}, {pipeline_mode = #tpu.pipeline_mode<synchronous>, transform_indices = @transform_1, window_bounds = array<i64: 64, 256>}, {pipeline_mode = #tpu.pipeline_mode<synchronous>, transform_indices = @transform_2, window_bounds = array<i64: 128, 256>}, {pipeline_mode = #tpu.pipeline_mode<synchronous>, transform_indices = @transform_3, window_bounds = array<i64: 1, 128>}, {pipeline_mode = #tpu.pipeline_mode<synchronous>, transform_indices = @transform_4, window_bounds = array<i64: 128, 128>}, {pipeline_mode = #tpu.pipeline_mode<synchronous>, transform_indices = @transform_5, window_bounds = array<i64: 1, 128>}, {pipeline_mode = #tpu.pipeline_mode<synchronous>, transform_indices = @transform_6, window_bounds = array<i64: 128, 128>}, {pipeline_mode = #tpu.pipeline_mode<synchronous>, transform_indices = @transform_7, window_bounds = array<i64: 1, 128>}, {transform_indices = @transform_8, window_bounds = array<i64: 8, 128>}]} {
    %c0 = arith.constant 0 : index
    %c0_0 = arith.constant 0 : index
    %0 = vector.load %arg1[%c0, %c0_0] : memref<8x64xf32, #tpu.memory_space<vmem>>, vector<8x64xf32>
    %1 = arith.truncf %0 : vector<8x64xf32> to vector<8x64xbf16>
    %c0_1 = arith.constant 0 : index
    %c0_2 = arith.constant 0 : index
    %2 = vector.load %arg2[%c0_1, %c0_2] : memref<64x256xbf16, #tpu.memory_space<vmem>>, vector<64x256xbf16>
    %cst = arith.constant dense<0.000000e+00> : vector<8x256xf32>
    %3 = tpu.matmul %1, %2, %cst {dimension_numbers = #tpu.dot_dimension_numbers<[1], [0], [0], [1], [0, 0, 1, 1], [], []>} : vector<8x64xbf16>, vector<64x256xbf16>, vector<8x256xf32> -> vector<8x256xf32>
    %4 = vector.extract_strided_slice %3 {offsets = [0, 0], sizes = [8, 128], strides = [1, 1]} : vector<8x256xf32> to vector<8x128xf32>
    %5 = vector.extract_strided_slice %3 {offsets = [0, 128], sizes = [8, 128], strides = [1, 1]} : vector<8x256xf32> to vector<8x128xf32>
    %6 = arith.mulf %4, %4 : vector<8x128xf32>
    %7 = arith.mulf %5, %5 : vector<8x128xf32>
    %8 = arith.addf %6, %7 : vector<8x128xf32>
    %9 = math.sqrt %8 : vector<8x128xf32>
    %10 = arith.truncf %9 : vector<8x128xf32> to vector<8x128xbf16>
    %c0_3 = arith.constant 0 : index
    %c0_4 = arith.constant 0 : index
    %11 = vector.load %arg3[%c0_3, %c0_4] : memref<128x256xbf16, #tpu.memory_space<vmem>>, vector<128x256xbf16>
    %cst_5 = arith.constant dense<0.000000e+00> : vector<8x256xf32>
    %12 = tpu.matmul %10, %11, %cst_5 {dimension_numbers = #tpu.dot_dimension_numbers<[1], [0], [0], [1], [0, 0, 1, 1], [], []>} : vector<8x128xbf16>, vector<128x256xbf16>, vector<8x256xf32> -> vector<8x256xf32>
    %13 = vector.extract_strided_slice %12 {offsets = [0, 0], sizes = [8, 128], strides = [1, 1]} : vector<8x256xf32> to vector<8x128xf32>
    %14 = vector.extract_strided_slice %12 {offsets = [0, 128], sizes = [8, 128], strides = [1, 1]} : vector<8x256xf32> to vector<8x128xf32>
    %15 = arith.maximumf %13, %14 : vector<8x128xf32>
    %c0_6 = arith.constant 0 : index
    %c0_7 = arith.constant 0 : index
    %16 = vector.load %arg4[%c0_6, %c0_7] : memref<1x128xf32, #tpu.memory_space<vmem>>, vector<1x128xf32>
    %17 = vector.broadcast %16 : vector<1x128xf32> to vector<8x128xf32>
    %18 = arith.addf %15, %17 : vector<8x128xf32>
    %cst_8 = arith.constant 0.000000e+00 : f32
    %19 = vector.broadcast %cst_8 : f32 to vector<8x128xf32>
    %20 = arith.maximumf %18, %19 : vector<8x128xf32>
    %21 = arith.truncf %20 : vector<8x128xf32> to vector<8x128xbf16>
    %c0_9 = arith.constant 0 : index
    %c0_10 = arith.constant 0 : index
    %22 = vector.load %arg5[%c0_9, %c0_10] : memref<128x128xbf16, #tpu.memory_space<vmem>>, vector<128x128xbf16>
    %cst_11 = arith.constant dense<0.000000e+00> : vector<8x128xf32>
    %23 = tpu.matmul %21, %22, %cst_11 {dimension_numbers = #tpu.dot_dimension_numbers<[1], [0], [0], [1], [0, 0, 1, 1], [], []>} : vector<8x128xbf16>, vector<128x128xbf16>, vector<8x128xf32> -> vector<8x128xf32>
    %c0_12 = arith.constant 0 : index
    %c0_13 = arith.constant 0 : index
    %24 = vector.load %arg6[%c0_12, %c0_13] : memref<1x128xf32, #tpu.memory_space<vmem>>, vector<1x128xf32>
    %25 = vector.broadcast %24 : vector<1x128xf32> to vector<8x128xf32>
    %26 = arith.addf %23, %25 : vector<8x128xf32>
    %cst_14 = arith.constant 0.000000e+00 : f32
    %27 = vector.broadcast %cst_14 : f32 to vector<8x128xf32>
    %28 = arith.maximumf %26, %27 : vector<8x128xf32>
    %29 = arith.truncf %28 : vector<8x128xf32> to vector<8x128xbf16>
    %c0_15 = arith.constant 0 : index
    %c0_16 = arith.constant 0 : index
    %30 = vector.load %arg7[%c0_15, %c0_16] : memref<128x128xbf16, #tpu.memory_space<vmem>>, vector<128x128xbf16>
    %cst_17 = arith.constant dense<0.000000e+00> : vector<8x128xf32>
    %31 = tpu.matmul %29, %30, %cst_17 {dimension_numbers = #tpu.dot_dimension_numbers<[1], [0], [0], [1], [0, 0, 1, 1], [], []>} : vector<8x128xbf16>, vector<128x128xbf16>, vector<8x128xf32> -> vector<8x128xf32>
    %c0_18 = arith.constant 0 : index
    %c0_19 = arith.constant 0 : index
    %32 = vector.load %arg8[%c0_18, %c0_19] : memref<1x128xf32, #tpu.memory_space<vmem>>, vector<1x128xf32>
    %33 = vector.broadcast %32 : vector<1x128xf32> to vector<8x128xf32>
    %34 = arith.addf %31, %33 : vector<8x128xf32>
    %c0_20 = arith.constant 0 : index
    %c0_21 = arith.constant 0 : index
    %35 = vector.load %arg9[%c0_20, %c0_21] : memref<8x128xf32, #tpu.memory_space<vmem>>, vector<8x128xf32>
    tpu.vector_store %arg9[%c0_20, %c0_21], %34 {strides = array<i32>} : memref<8x128xf32, #tpu.memory_space<vmem>>, vector<8x128xf32>,
    return
  }
  func.func @transform_0(%arg0: i32) -> (i32, i32) {
    %c0_i32 = arith.constant 0 : i32
    %c0_i32_0 = arith.constant 0 : i32
    return %arg0, %c0_i32 : i32, i32
  }
  func.func @transform_1(%arg0: i32) -> (i32, i32) {
    %c0_i32 = arith.constant 0 : i32
    %c0_i32_0 = arith.constant 0 : i32
    %c0_i32_1 = arith.constant 0 : i32
    return %c0_i32, %c0_i32_0 : i32, i32
  }
  func.func @transform_2(%arg0: i32) -> (i32, i32) {
    %c0_i32 = arith.constant 0 : i32
    %c0_i32_0 = arith.constant 0 : i32
    %c0_i32_1 = arith.constant 0 : i32
    return %c0_i32, %c0_i32_0 : i32, i32
  }
  func.func @transform_3(%arg0: i32) -> (i32, i32) {
    %c0_i32 = arith.constant 0 : i32
    %c0_i32_0 = arith.constant 0 : i32
    %c0_i32_1 = arith.constant 0 : i32
    return %c0_i32, %c0_i32_0 : i32, i32
  }
  func.func @transform_4(%arg0: i32) -> (i32, i32) {
    %c0_i32 = arith.constant 0 : i32
    %c0_i32_0 = arith.constant 0 : i32
    %c0_i32_1 = arith.constant 0 : i32
    return %c0_i32, %c0_i32_0 : i32, i32
  }
  func.func @transform_5(%arg0: i32) -> (i32, i32) {
    %c0_i32 = arith.constant 0 : i32
    %c0_i32_0 = arith.constant 0 : i32
    %c0_i32_1 = arith.constant 0 : i32
    return %c0_i32, %c0_i32_0 : i32, i32
  }
  func.func @transform_6(%arg0: i32) -> (i32, i32) {
    %c0_i32 = arith.constant 0 : i32
    %c0_i32_0 = arith.constant 0 : i32
    %c0_i32_1 = arith.constant 0 : i32
    return %c0_i32, %c0_i32_0 : i32, i32
  }
  func.func @transform_7(%arg0: i32) -> (i32, i32) {
    %c0_i32 = arith.constant 0 : i32
    %c0_i32_0 = arith.constant 0 : i32
    %c0_i32_1 = arith.constant 0 : i32
    return %c0_i32, %c0_i32_0 : i32, i32
  }
  func.func @transform_8(%arg0: i32) -> (i32, i32) {
    %c0_i32 = arith.constant 0 : i32
    %c0_i32_0 = arith.constant 0 : i32
    return %arg0, %c0_i32 : i32, i32
  }
}

</mosaic_0001>

<llo_original>
// kernel: tpu_custom_call.1
$region0: #{tpu_custom_call.1}
  #allocation0 [shape = 'u32[]', space=smem, size = 0x4, offset = 0x4, fixed_abs, tag = 'smem constant byte address 0x4 - core index']
  #allocation1 [shape = 'u32[72,128]{1,0:T(1,128)}', space=vmem, size = 0x9000, scoped, tag = 'internal scratch']
  %s0 = inlined_call_operand.hbm [shape: f32[8,64], index: 0, kind: input, shape index: {}]
  %s1 = inlined_call_operand.hbm [shape: bf16[64,256], index: 1, kind: input, shape index: {}]
  %s2 = inlined_call_operand.hbm [shape: bf16[128,256], index: 2, kind: input, shape index: {}]
  %s3 = inlined_call_operand.vmem [shape: f32[1,128], index: 3, kind: input, shape index: {}]
  %s4 = inlined_call_operand.hbm [shape: bf16[128,128], index: 4, kind: input, shape index: {}]
  %s5 = inlined_call_operand.vmem [shape: f32[1,128], index: 5, kind: input, shape index: {}]
  %s6 = inlined_call_operand.hbm [shape: bf16[128,128], index: 6, kind: input, shape index: {}]
  %s7 = inlined_call_operand.vmem [shape: f32[1,128], index: 7, kind: input, shape index: {}]
  %s8 = inlined_call_operand.hbm [shape: f32[8,128], index: 8, kind: output, shape index: {}]
  %s9 = sld [smem:[#allocation0]]
  $region62: #{tpu_custom_call.1} parent=0
    _
  %s11 = ssub.s32 1, %s9
  %s12 = scalar_select 0, %s11, %s9
  $region1: #{tpu_custom_call.1} parent=0
    #allocation2 [shape = 'u8[4096]{0}', space=vmem, size = 0x1000, scoped, tag = 'input window, operand 0, single buffered']
    #allocation3 [shape = 's32[1]{0}', space=sflag, size = 0x4, scoped, tag = 'scoped memory for tpu_custom_call.1']
    #allocation4 [shape = 's32[1]{0}', space=sflag, size = 0x4, scoped, tag = 'scoped memory for tpu_custom_call.1']
    #allocation5 [shape = 'u8[32768]{0}', space=vmem, size = 0x8000, scoped, tag = 'input window, operand 1, single buffered']
    #allocation6 [shape = 's32[1]{0}', space=sflag, size = 0x4, scoped, tag = 'scoped memory for tpu_custom_call.1']
    #allocation7 [shape = 'u8[65536]{0}', space=vmem, size = 0x10000, scoped, tag = 'input window, operand 2, single buffered']
    #allocation8 [shape = 'u8[32768]{0}', space=vmem, size = 0x8000, scoped, tag = 'input window, operand 4, single buffered']
    #allocation9 [shape = 's32[1]{0}', space=sflag, size = 0x4, scoped, tag = 'scoped memory for tpu_custom_call.1']
    #allocation10 [shape = 'u8[32768]{0}', space=vmem, size = 0x8000, scoped, tag = 'input window, operand 6, single buffered']
    #allocation11 [shape = 'u8[4096]{0}', space=vmem, size = 0x1000, scoped, tag = 'output window, operand 0, single buffered']
    %13 = vsyncpa [#allocation3], 0
    %14 = vsyncpa [#allocation6], 0
    %15 = vsyncpa [#allocation9], 0
    %16 = vsyncpa [#allocation4], 0
    // Predicated region
    $region2: #{tpu_custom_call.1} parent=1 // pred_check
      _
    $region3: #{tpu_custom_call.1} parent=1 // pred_check_branch
      %18 = sbr.rel (0) target = $region5
    $region4: #{tpu_custom_call.1} parent=1 // pred_region
      %20 = vsyncadd [#allocation3], 0
      %s22 = sshll.u32 %s0, 4
      %s23 = int_to_ptr.hbm [resolvable:$true] %s22
      %s24 = sshll.u32 [#allocation2], 4
      %s25 = int_to_ptr.vmem [resolvable:$true] %s24
      %27 = dma.hbm_to_vmem [thread:$0]  %s23, 128, %s25, [#allocation3]
    $region5: #{tpu_custom_call.1} parent=1 // pred_fallthru
      _
    // Predicated region
    $region6: #{tpu_custom_call.1} parent=1 // pred_check
      _
    $region7: #{tpu_custom_call.1} parent=1 // pred_check_branch
      %29 = sbr.rel (0) target = $region9
    $region8: #{tpu_custom_call.1} parent=1 // pred_region
      %31 = vsyncadd [#allocation6], 0
      %s32 = sshll.u32 %s1, 4
      %s33 = int_to_ptr.hbm [resolvable:$true] %s32
      %s34 = sshll.u32 [#allocation5], 4
      %s35 = int_to_ptr.vmem [resolvable:$true] %s34
      %40 = dma.hbm_to_vmem [thread:$0]  %s33, 1024, %s35, [#allocation6], 128, 128, 8
    $region9: #{tpu_custom_call.1} parent=1 // pred_fallthru
      _
    // Predicated region
    $region10: #{tpu_custom_call.1} parent=1 // pred_check
      _
    $region11: #{tpu_custom_call.1} parent=1 // pred_check_branch
      %42 = sbr.rel (0) target = $region13
    $region12: #{tpu_custom_call.1} parent=1 // pred_region
      %44 = vsyncadd [#allocation6], 0
      %s45 = sshll.u32 %s2, 4
      %s46 = int_to_ptr.hbm [resolvable:$true] %s45
      %s47 = sshll.u32 [#allocation7], 4
      %s48 = int_to_ptr.vmem [resolvable:$true] %s47
      %53 = dma.hbm_to_vmem [thread:$0]  %s46, 2048, %s48, [#allocation6], 128, 128, 8
    $region13: #{tpu_custom_call.1} parent=1 // pred_fallthru
      _
    // Predicated region
    $region14: #{tpu_custom_call.1} parent=1 // pred_check
      _
    $region15: #{tpu_custom_call.1} parent=1 // pred_check_branch
      %55 = sbr.rel (0) target = $region17
    $region16: #{tpu_custom_call.1} parent=1 // pred_region
      _
    $region17: #{tpu_custom_call.1} parent=1 // pred_fallthru
      _
    // Predicated region
    $region18: #{tpu_custom_call.1} parent=1 // pred_check
      _
    $region19: #{tpu_custom_call.1} parent=1 // pred_check_branch
      %57 = sbr.rel (0) target = $region21
    $region20: #{tpu_custom_call.1} parent=1 // pred_region
      %59 = vsyncadd [#allocation9], 0
      %s60 = sshll.u32 %s4, 4
      %s61 = int_to_ptr.hbm [resolvable:$true] %s60
      %s62 = sshll.u32 [#allocation8], 4
      %s63 = int_to_ptr.vmem [resolvable:$true] %s62
      %68 = dma.hbm_to_vmem [thread:$0]  %s61, 1024, %s63, [#allocation9], 64, 64, 4
    $region21: #{tpu_custom_call.1} parent=1 // pred_fallthru
      _
    // Predicated region
    $region22: #{tpu_custom_call.1} parent=1 // pred_check
      _
    $region23: #{tpu_custom_call.1} parent=1 // pred_check_branch
      %70 = sbr.rel (0) target = $region25
    $region24: #{tpu_custom_call.1} parent=1 // pred_region
      _
    $region25: #{tpu_custom_call.1} parent=1 // pred_fallthru
      _
    // Predicated region
    $region26: #{tpu_custom_call.1} parent=1 // pred_check
      _
    $region27: #{tpu_custom_call.1} parent=1 // pred_check_branch
      %72 = sbr.rel (0) target = $region29
    $region28: #{tpu_custom_call.1} parent=1 // pred_region
      %74 = vsyncadd [#allocation9], 0
      %s75 = sshll.u32 %s6, 4
      %s76 = int_to_ptr.hbm [resolvable:$true] %s75
      %s77 = sshll.u32 [#allocation10], 4
      %s78 = int_to_ptr.vmem [resolvable:$true] %s77
      %83 = dma.hbm_to_vmem [thread:$0]  %s76, 1024, %s78, [#allocation9], 64, 64, 4
    $region29: #{tpu_custom_call.1} parent=1 // pred_fallthru
      _
    // Predicated region
    $region30: #{tpu_custom_call.1} parent=1 // pred_check
      _
    $region31: #{tpu_custom_call.1} parent=1 // pred_check_branch
      %85 = sbr.rel (0) target = $region33
    $region32: #{tpu_custom_call.1} parent=1 // pred_region
      _
    $region33: #{tpu_custom_call.1} parent=1 // pred_fallthru
      _
    // Predicated region
    $region34: #{tpu_custom_call.1} parent=1 // pred_check
      _
    $region35: #{tpu_custom_call.1} parent=1 // pred_check_branch
      %87 = sbr.rel (0) target = $region37
    $region36: #{tpu_custom_call.1} parent=1 // pred_region
      %89 = dma.done [#allocation3], 128
    $region37: #{tpu_custom_call.1} parent=1 // pred_fallthru
      _
    // Predicated region
    $region38: #{tpu_custom_call.1} parent=1 // pred_check
      _
    $region39: #{tpu_custom_call.1} parent=1 // pred_check_branch
      %91 = sbr.rel (0) target = $region41
    $region40: #{tpu_custom_call.1} parent=1 // pred_region
      %93 = dma.done [#allocation6], 1024
    $region41: #{tpu_custom_call.1} parent=1 // pred_fallthru
      _
    // Predicated region
    $region42: #{tpu_custom_call.1} parent=1 // pred_check
      _
    $region43: #{tpu_custom_call.1} parent=1 // pred_check_branch
      %95 = sbr.rel (0) target = $region45
    $region44: #{tpu_custom_call.1} parent=1 // pred_region
      %97 = dma.done [#allocation6], 2048
    $region45: #{tpu_custom_call.1} parent=1 // pred_fallthru
      _
    // Predicated region
    $region46: #{tpu_custom_call.1} parent=1 // pred_check
      _
    $region47: #{tpu_custom_call.1} parent=1 // pred_check_branch
      %99 = sbr.rel (0) target = $region49
    $region48: #{tpu_custom_call.1} parent=1 // pred_region
      %101 = dma.done [#allocation9], 1024
    $region49: #{tpu_custom_call.1} parent=1 // pred_fallthru
      _
    // Predicated region
    $region50: #{tpu_custom_call.1} parent=1 // pred_check
      _
    $region51: #{tpu_custom_call.1} parent=1 // pred_check_branch
      %103 = sbr.rel (0) target = $region53
    $region52: #{tpu_custom_call.1} parent=1 // pred_region
      %105 = dma.done [#allocation9], 1024
    $region53: #{tpu_custom_call.1} parent=1 // pred_fallthru
      _
    %v107 = vld [vmem:[#allocation2] sm:$0xff]
    %v108 = vpack.c.bf16 %v107, %v107
    %v109 = vld [vmem:[#allocation5] sm:$0xff]
    %v110 = vld [vmem:[#allocation5 + $0x8] sm:$0xff]
    %v111 = vld [vmem:[#allocation5 + $0x10] sm:$0xff]
    %v112 = vld [vmem:[#allocation5 + $0x18] sm:$0xff]
    %v113 = vld [vmem:[#allocation5 + $0x20] sm:$0xff]
    %v114 = vld [vmem:[#allocation5 + $0x28] sm:$0xff]
    %v115 = vld [vmem:[#allocation5 + $0x30] sm:$0xff]
    %v116 = vld [vmem:[#allocation5 + $0x38] sm:$0xff]
    %v125 = vunpack.c.l.b16 %v109
    %v126 = vunpack.c.h.b16 %v109
    %v127 = vunpack.c.l.b16 %v110
    %v128 = vunpack.c.h.b16 %v110
    %v129 = vunpack.c.l.b16 %v111
    %v130 = vunpack.c.h.b16 %v111
    %v131 = vunpack.c.l.b16 %v112
    %v132 = vunpack.c.h.b16 %v112
    %v133 = vunpack.c.l.b16 %v113
    %v134 = vunpack.c.h.b16 %v113
    %v135 = vunpack.c.l.b16 %v114
    %v136 = vunpack.c.h.b16 %v114
    %v137 = vunpack.c.l.b16 %v115
    %v138 = vunpack.c.h.b16 %v115
    %v139 = vunpack.c.l.b16 %v116
    %v140 = vunpack.c.h.b16 %v116
    %v141 = vpack.c.b16 %v127, %v125
    %v142 = vpack.c.b16 %v128, %v126
    %v143 = vpack.c.b16 %v131, %v129
    %v144 = vpack.c.b16 %v132, %v130
    %v145 = vpack.c.b16 %v135, %v133
    %v146 = vpack.c.b16 %v136, %v134
    %v147 = vpack.c.b16 %v139, %v137
    %v148 = vpack.c.b16 %v140, %v138
    %vm157 = vcmask 523264
    %v159 = vsel %vm157, %v108, 0
    %161 = vmatpush.bf16.msra.mxu0 0
    %162 = vmatpush.bf16.msra.mxu0 0
    %163 = vmatpush.bf16.msra.mxu0 0
    %164 = vmatpush.bf16.msra.mxu0 0
    %165 = vmatpush.bf16.msra.mxu0 %v147
    %166 = vmatpush.bf16.msra.mxu0 %v145
    %167 = vmatpush.bf16.msra.mxu0 %v143
    %168 = vmatpush.bf16.msra.mxu0 %v141
    %169 = vmatmul.bf16.gmra.mxu0 %v159
    %v170 = vpop.f32.mrf.mxu0
    %v171 = vadd.f32 0.0, %v170
    %v172 = vpop.f32.mrf.mxu0
    %173 = vdwg.mxu0
    %174 = vmatpush.bf16.msra.mxu0 0
    %175 = vmatpush.bf16.msra.mxu0 0
    %176 = vmatpush.bf16.msra.mxu0 0
    %177 = vmatpush.bf16.msra.mxu0 0
    %178 = vmatpush.bf16.msra.mxu0 %v148
    %179 = vmatpush.bf16.msra.mxu0 %v146
    %180 = vmatpush.bf16.msra.mxu0 %v144
    %181 = vmatpush.bf16.msra.mxu0 %v142
    %182 = vmatmul.bf16.gmra.mxu0 %v159
    %v183 = vpop.f32.mrf.mxu0
    %v184 = vadd.f32 0.0, %v183
    %v185 = vpop.f32.mrf.mxu0
    %186 = vdwg.mxu0
    %v187 = vmul.f32 %v171, %v171
    %v188 = vmul.f32 %v184, %v184
    %v189 = vadd.f32 %v187, %v188
    %v190 = vrsqrt.pop %v189
    %v191 = vmul.f32 %v190, %v189
    %v192 = vmul.f32 %v191, %v190
    %v193 = vmul.f32 0.5, %v192
    %v194 = vsub.f32 1.5, %v193
    %v195 = vmul.f32 %v190, %v194
    %v196 = vmul.f32 %v189, %v195
    %vm197 = vcmp.eq.f32.partialorder %v189, inf
    %v198 = vsel %vm197, %v189, %v196
    %vm199 = vcmp.eq.f32.partialorder %v189, 0.0
    %v200 = vand.u32 %v189, 2147483648
    %v201 = vsel %vm199, %v200, %v198
    %v202 = vpack.c.bf16 %v201, %v201
    %v203 = vld [vmem:[#allocation7] sm:$0xff]
    %v204 = vld [vmem:[#allocation7 + $0x8] sm:$0xff]
    %v205 = vld [vmem:[#allocation7 + $0x10] sm:$0xff]
    %v206 = vld [vmem:[#allocation7 + $0x18] sm:$0xff]
    %v207 = vld [vmem:[#allocation7 + $0x20] sm:$0xff]
    %v208 = vld [vmem:[#allocation7 + $0x28] sm:$0xff]
    %v209 = vld [vmem:[#allocation7 + $0x30] sm:$0xff]
    %v210 = vld [vmem:[#allocation7 + $0x38] sm:$0xff]
    %v211 = vld [vmem:[#allocation7 + $0x40] sm:$0xff]
    %v212 = vld [vmem:[#allocation7 + $0x48] sm:$0xff]
    %v213 = vld [vmem:[#allocation7 + $0x50] sm:$0xff]
    %v214 = vld [vmem:[#allocation7 + $0x58] sm:$0xff]
    %v215 = vld [vmem:[#allocation7 + $0x60] sm:$0xff]
    %v216 = vld [vmem:[#allocation7 + $0x68] sm:$0xff]
    %v217 = vld [vmem:[#allocation7 + $0x70] sm:$0xff]
    %v218 = vld [vmem:[#allocation7 + $0x78] sm:$0xff]
    %v235 = vunpack.c.l.b16 %v203
    %v236 = vunpack.c.h.b16 %v203
    %v237 = vunpack.c.l.b16 %v204
    %v238 = vunpack.c.h.b16 %v204
    %v239 = vunpack.c.l.b16 %v205
    %v240 = vunpack.c.h.b16 %v205
    %v241 = vunpack.c.l.b16 %v206
    %v242 = vunpack.c.h.b16 %v206
    %v243 = vunpack.c.l.b16 %v207
    %v244 = vunpack.c.h.b16 %v207
    %v245 = vunpack.c.l.b16 %v208
    %v246 = vunpack.c.h.b16 %v208
    %v247 = vunpack.c.l.b16 %v209
    %v248 = vunpack.c.h.b16 %v209
    %v249 = vunpack.c.l.b16 %v210
    %v250 = vunpack.c.h.b16 %v210
    %v251 = vunpack.c.l.b16 %v211
    %v252 = vunpack.c.h.b16 %v211
    %v253 = vunpack.c.l.b16 %v212
    %v254 = vunpack.c.h.b16 %v212
    %v255 = vunpack.c.l.b16 %v213
    %v256 = vunpack.c.h.b16 %v213
    %v257 = vunpack.c.l.b16 %v214
    %v258 = vunpack.c.h.b16 %v214
    %v259 = vunpack.c.l.b16 %v215
    %v260 = vunpack.c.h.b16 %v215
    %v261 = vunpack.c.l.b16 %v216
    %v262 = vunpack.c.h.b16 %v216
    %v263 = vunpack.c.l.b16 %v217
    %v264 = vunpack.c.h.b16 %v217
    %v265 = vunpack.c.l.b16 %v218
    %v266 = vunpack.c.h.b16 %v218
    %v267 = vpack.c.b16 %v237, %v235
    %v268 = vpack.c.b16 %v238, %v236
    %v269 = vpack.c.b16 %v241, %v239
    %v270 = vpack.c.b16 %v242, %v240
    %v271 = vpack.c.b16 %v245, %v243
    %v272 = vpack.c.b16 %v246, %v244
    %v273 = vpack.c.b16 %v249, %v247
    %v274 = vpack.c.b16 %v250, %v248
    %v275 = vpack.c.b16 %v253, %v251
    %v276 = vpack.c.b16 %v254, %v252
    %v277 = vpack.c.b16 %v257, %v255
    %v278 = vpack.c.b16 %v258, %v256
    %v279 = vpack.c.b16 %v261, %v259
    %v280 = vpack.c.b16 %v262, %v260
    %v281 = vpack.c.b16 %v265, %v263
    %v282 = vpack.c.b16 %v266, %v264
    %299 = vmatpush.bf16.msra.mxu0 %v281
    %300 = vmatpush.bf16.msra.mxu0 %v279
    %301 = vmatpush.bf16.msra.mxu0 %v277
    %302 = vmatpush.bf16.msra.mxu0 %v275
    %303 = vmatpush.bf16.msra.mxu0 %v273
    %304 = vmatpush.bf16.msra.mxu0 %v271
    %305 = vmatpush.bf16.msra.mxu0 %v269
    %306 = vmatpush.bf16.msra.mxu0 %v267
    %307 = vmatmul.bf16.gmra.mxu0 %v202
    %v308 = vpop.f32.mrf.mxu0
    %v309 = vadd.f32 0.0, %v308
    %v310 = vpop.f32.mrf.mxu0
    %311 = vdwg.mxu0
    %312 = vmatpush.bf16.msra.mxu0 %v282
    %313 = vmatpush.bf16.msra.mxu0 %v280
    %314 = vmatpush.bf16.msra.mxu0 %v278
    %315 = vmatpush.bf16.msra.mxu0 %v276
    %316 = vmatpush.bf16.msra.mxu0 %v274
    %317 = vmatpush.bf16.msra.mxu0 %v272
    %318 = vmatpush.bf16.msra.mxu0 %v270
    %319 = vmatpush.bf16.msra.mxu0 %v268
    %320 = vmatmul.bf16.gmra.mxu0 %v202
    %v321 = vpop.f32.mrf.mxu0
    %v322 = vadd.f32 0.0, %v321
    %v323 = vpop.f32.mrf.mxu0
    %324 = vdwg.mxu0
    %v325 = vmax.f32 %v309, %v322
    %v326 = vld [vmem:[%s3] sm:$0x1]
    %v328 = vperm.slane %v326, 0
    %v330 = vadd.f32 %v325, %v328
    %v331 = vmax.f32 %v330, 0.0
    %v332 = vpack.c.bf16 %v331, %v331
    %v333 = vld [vmem:[#allocation8] sm:$0xf]
    %v334 = vld [vmem:[#allocation8 + $0x4] sm:$0xf]
    %v335 = vld [vmem:[#allocation8 + $0x8] sm:$0xf]
    %v336 = vld [vmem:[#allocation8 + $0xc] sm:$0xf]
    %v337 = vld [vmem:[#allocation8 + $0x10] sm:$0xf]
    %v338 = vld [vmem:[#allocation8 + $0x14] sm:$0xf]
    %v339 = vld [vmem:[#allocation8 + $0x18] sm:$0xf]
    %v340 = vld [vmem:[#allocation8 + $0x1c] sm:$0xf]
    %v341 = vld [vmem:[#allocation8 + $0x20] sm:$0xf]
    %v342 = vld [vmem:[#allocation8 + $0x24] sm:$0xf]
    %v343 = vld [vmem:[#allocation8 + $0x28] sm:$0xf]
    %v344 = vld [vmem:[#allocation8 + $0x2c] sm:$0xf]
    %v345 = vld [vmem:[#allocation8 + $0x30] sm:$0xf]
    %v346 = vld [vmem:[#allocation8 + $0x34] sm:$0xf]
    %v347 = vld [vmem:[#allocation8 + $0x38] sm:$0xf]
    %v348 = vld [vmem:[#allocation8 + $0x3c] sm:$0xf]
    %v349 = vld [vmem:[%s5] sm:$0x1]
    %v351 = vperm.slane %v349, 0
    %v369 = vunpack.c.l.b16 %v333
    %v370 = vunpack.c.l.b16 %v334
    %v371 = vunpack.c.l.b16 %v335
    %v372 = vunpack.c.l.b16 %v336
    %v373 = vunpack.c.l.b16 %v337
    %v374 = vunpack.c.l.b16 %v338
    %v375 = vunpack.c.l.b16 %v339
    %v376 = vunpack.c.l.b16 %v340
    %v377 = vunpack.c.l.b16 %v341
    %v378 = vunpack.c.l.b16 %v342
    %v379 = vunpack.c.l.b16 %v343
    %v380 = vunpack.c.l.b16 %v344
    %v381 = vunpack.c.l.b16 %v345
    %v382 = vunpack.c.l.b16 %v346
    %v383 = vunpack.c.l.b16 %v347
    %v384 = vunpack.c.l.b16 %v348
    %v385 = vpack.c.b16 %v370, %v369
    %v386 = vpack.c.b16 %v372, %v371
    %v387 = vpack.c.b16 %v374, %v373
    %v388 = vpack.c.b16 %v376, %v375
    %v389 = vpack.c.b16 %v378, %v377
    %v390 = vpack.c.b16 %v380, %v379
    %v391 = vpack.c.b16 %v382, %v381
    %v392 = vpack.c.b16 %v384, %v383
    %401 = vmatpush.bf16.msra.mxu0 %v392
    %402 = vmatpush.bf16.msra.mxu0 %v391
    %403 = vmatpush.bf16.msra.mxu0 %v390
    %404 = vmatpush.bf16.msra.mxu0 %v389
    %405 = vmatpush.bf16.msra.mxu0 %v388
    %406 = vmatpush.bf16.msra.mxu0 %v387
    %407 = vmatpush.bf16.msra.mxu0 %v386
    %408 = vmatpush.bf16.msra.mxu0 %v385
    %409 = vmatmul.bf16.gmra.mxu0 %v332
    %v410 = vpop.f32.mrf.mxu0
    %v411 = vadd.f32 %v351, %v410
    %v412 = vpop.f32.mrf.mxu0
    %413 = vdwg.mxu0
    %v414 = vmax.f32 %v411, 0.0
    %v415 = vpack.c.bf16 %v414, %v414
    %v416 = vld [vmem:[#allocation10] sm:$0xf]
    %v417 = vld [vmem:[#allocation10 + $0x4] sm:$0xf]
    %v418 = vld [vmem:[#allocation10 + $0x8] sm:$0xf]
    %v419 = vld [vmem:[#allocation10 + $0xc] sm:$0xf]
    %v420 = vld [vmem:[#allocation10 + $0x10] sm:$0xf]
    %v421 = vld [vmem:[#allocation10 + $0x14] sm:$0xf]
    %v422 = vld [vmem:[#allocation10 + $0x18] sm:$0xf]
    %v423 = vld [vmem:[#allocation10 + $0x1c] sm:$0xf]
    %v424 = vld [vmem:[#allocation10 + $0x20] sm:$0xf]
    %v425 = vld [vmem:[#allocation10 + $0x24] sm:$0xf]
    %v426 = vld [vmem:[#allocation10 + $0x28] sm:$0xf]
    %v427 = vld [vmem:[#allocation10 + $0x2c] sm:$0xf]
    %v428 = vld [vmem:[#allocation10 + $0x30] sm:$0xf]
    %v429 = vld [vmem:[#allocation10 + $0x34] sm:$0xf]
    %v430 = vld [vmem:[#allocation10 + $0x38] sm:$0xf]
    %v431 = vld [vmem:[#allocation10 + $0x3c] sm:$0xf]
    %v432 = vld [vmem:[%s7] sm:$0x1]
    %v434 = vperm.slane %v432, 0
    %v452 = vunpack.c.l.b16 %v416
    %v453 = vunpack.c.l.b16 %v417
    %v454 = vunpack.c.l.b16 %v418
    %v455 = vunpack.c.l.b16 %v419
    %v456 = vunpack.c.l.b16 %v420
    %v457 = vunpack.c.l.b16 %v421
    %v458 = vunpack.c.l.b16 %v422
    %v459 = vunpack.c.l.b16 %v423
    %v460 = vunpack.c.l.b16 %v424
    %v461 = vunpack.c.l.b16 %v425
    %v462 = vunpack.c.l.b16 %v426
    %v463 = vunpack.c.l.b16 %v427
    %v464 = vunpack.c.l.b16 %v428
    %v465 = vunpack.c.l.b16 %v429
    %v466 = vunpack.c.l.b16 %v430
    %v467 = vunpack.c.l.b16 %v431
    %v468 = vpack.c.b16 %v453, %v452
    %v469 = vpack.c.b16 %v455, %v454
    %v470 = vpack.c.b16 %v457, %v456
    %v471 = vpack.c.b16 %v459, %v458
    %v472 = vpack.c.b16 %v461, %v460
    %v473 = vpack.c.b16 %v463, %v462
    %v474 = vpack.c.b16 %v465, %v464
    %v475 = vpack.c.b16 %v467, %v466
    %484 = vmatpush.bf16.msra.mxu0 %v475
    %485 = vmatpush.bf16.msra.mxu0 %v474
    %486 = vmatpush.bf16.msra.mxu0 %v473
    %487 = vmatpush.bf16.msra.mxu0 %v472
    %488 = vmatpush.bf16.msra.mxu0 %v471
    %489 = vmatpush.bf16.msra.mxu0 %v470
    %490 = vmatpush.bf16.msra.mxu0 %v469
    %491 = vmatpush.bf16.msra.mxu0 %v468
    %492 = vmatmul.bf16.gmra.mxu0 %v415
    %v493 = vpop.f32.mrf.mxu0
    %v494 = vadd.f32 %v434, %v493
    %v495 = vpop.f32.mrf.mxu0
    %496 = vdwg.mxu0
    %497 = vst [vmem:[#allocation11] sm:$0xff] %v494
    // Predicated region
    $region54: #{tpu_custom_call.1} parent=1 // pred_check
      _
    $region55: #{tpu_custom_call.1} parent=1 // pred_check_branch
      %499 = sbr.rel (0) target = $region57
    $region56: #{tpu_custom_call.1} parent=1 // pred_region
      %501 = vsyncadd [#allocation4], 0
      %s503 = sshll.u32 [#allocation11], 4
      %s504 = int_to_ptr.vmem [resolvable:$true] %s503
      %s505 = sshll.u32 %s8, 4
      %s506 = int_to_ptr.hbm [resolvable:$true] %s505
      %508 = dma.vmem_to_hbm [thread:$0]  %s504, 128, %s506, [#allocation4]
    $region57: #{tpu_custom_call.1} parent=1 // pred_fallthru
      _
    // Predicated region
    $region58: #{tpu_custom_call.1} parent=1 // pred_check
      _
    $region59: #{tpu_custom_call.1} parent=1 // pred_check_branch
      %510 = sbr.rel (0) target = $region61
    $region60: #{tpu_custom_call.1} parent=1 // pred_region
      %512 = dma.done [#allocation4], 128
    $region61: #{tpu_custom_call.1} parent=1 // pred_fallthru
      _
    %513 = vsyncpa [#allocation3], 1
    %514 = vsyncpa [#allocation6], 1
    %515 = vsyncpa [#allocation9], 1
    %516 = vsyncpa [#allocation4], 1

</llo_original>
